<compile_context>
chip_gen: v7x
topology: tpu7x:2x2x1
jax: 0.10.0
libtpu: 0.0.40
codegen_flags: <defaults>
</compile_context>

<pallas_src>
import jax
import jax.numpy as jnp
from jax.experimental import pallas as pl
from jax.experimental.pallas import tpu as pltpu


def _scorer_kernel(ids_p_ref, ids_n_ref, len_p_ref, len_n_ref,
                   s_ref, b_ref, o_ref):
    """out = sigmoid(lp - ln); lp/ln = (masked-mean one-hot hist) . s + b."""
    T, TB = ids_p_ref.shape          # ids blocks are [T, TB] (batch on lanes)
    V = s_ref.shape[0]               # folded score table [V, 1]

    lens_p = len_p_ref[...]                                    # [1, TB] i32
    lens_n = len_n_ref[...]                                    # [1, TB] i32
    # guard len == 0 (would otherwise produce inf/NaN); also covers padded
    # lanes of a partial final batch block (those outputs are discarded).
    inv_p = 1.0 / jnp.maximum(lens_p, 1).astype(jnp.float32)   # [1, TB]
    inv_n = 1.0 / jnp.maximum(lens_n, 1).astype(jnp.float32)   # [1, TB]

    # Hoisted once, shared by the pos and neg accumulations.
    vocab = jax.lax.broadcasted_iota(jnp.int32, (V, TB), 0)    # [V, TB]

    def body(t, carry):
        hp, hn = carry
        idp = ids_p_ref[pl.ds(t, 1), :]                        # [1, TB]
        idn = ids_n_ref[pl.ds(t, 1), :]
        wp = jnp.where(t < lens_p, inv_p, 0.0)                 # [1, TB]
        wn = jnp.where(t < lens_n, inv_n, 0.0)
        # Length-weighted one-hot histogram over the vocab, accumulated on a
        # [V, TB] slab (no [T, V, TB] intermediate ever exists).
        # TODO(synk): out-of-range ids contribute 0 here, whereas a torch/jax
        # embedding lookup would wrap/clamp; inputs are assumed in [0, V).
        hp = hp + jnp.where(idp == vocab, wp, 0.0)             # [V, TB]
        hn = hn + jnp.where(idn == vocab, wn, 0.0)
        return hp, hn

    zero = jnp.zeros((V, TB), jnp.float32)
    hp, hn = jax.lax.fori_loop(0, T, body, (zero, zero),
                               unroll=True if T <= 64 else 8)

    s = s_ref[...]                                             # [V, 1]
    bias = b_ref[...]                                          # [1, 1]
    # Folded N=1 head: logit = sum_v hist[v, b] * s[v] + b  (sublane reduce).
    lp = jnp.sum(hp * s, axis=0, keepdims=True) + bias         # [1, TB]
    ln = jnp.sum(hn * s, axis=0, keepdims=True) + bias         # [1, TB]
    # exp(lp)/(exp(lp)+exp(ln)) == sigmoid(lp - ln): single exp, overflow-safe.
    o_ref[...] = 1.0 / (1.0 + jnp.exp(ln - lp))                # [1, TB]


def scorer_forward(ids_pos, ids_neg, len_pos, len_neg, emb, w, b, *, tb=None):
    """ids_*: [B,T] int, len_*: [B] int, emb: [V,H] f32, w: [1,H], b: [1,1] -> [B]."""
    B, T = ids_pos.shape
    V, H = emb.shape
    if tb is None:
        # Lane axis carries the batch, so tiles must be 128-wide or full-B.
        # tb=128 gives >=2 grid steps (both v7x TensorCores) whenever B > 128.
        tb = B if B <= 128 else 128

    # Fold the N=1 linear head into the table: s[v] = emb[v] . w   -> [V, 1]
    s = jnp.sum(emb.astype(jnp.float32) * w.astype(jnp.float32),
                axis=-1, keepdims=True)
    b2 = jnp.asarray(b, jnp.float32).reshape(1, 1)

    # Lane-major layouts: ids [T, B], lengths [1, B], output [1, B].
    ids_p = ids_pos.astype(jnp.int32).T
    ids_n = ids_neg.astype(jnp.int32).T
    lp = len_pos.astype(jnp.int32).reshape(1, B)
    ln = len_neg.astype(jnp.int32).reshape(1, B)

    ids_spec = pl.BlockSpec((T, tb), lambda i: (0, i))
    len_spec = pl.BlockSpec((1, tb), lambda i: (0, i))
    s_spec = pl.BlockSpec((V, 1), lambda i: (0, 0))    # tiny resident constant
    b_spec = pl.BlockSpec((1, 1), lambda i: (0, 0))
    o_spec = pl.BlockSpec((1, tb), lambda i: (0, i))   # lane-dense stores

    cost = pl.CostEstimate(
        flops=2 * (3 * B * T * V + 2 * B * V + 2 * B),
        transcendentals=B,
        bytes_accessed=2 * B * T * 4 + 2 * B * 4 + V * 4 + 4 + B * 4,
    )

    out = pl.pallas_call(
        _scorer_kernel,
        out_shape=jax.ShapeDtypeStruct((1, B), jnp.float32),
        grid_spec=pltpu.PrefetchScalarGridSpec(
            num_scalar_prefetch=0,
            grid=(pl.cdiv(B, tb),),
            in_specs=[ids_spec, ids_spec, len_spec, len_spec, s_spec, b_spec],
            out_specs=o_spec,
        ),
        compiler_params=pltpu.CompilerParams(
            # batch axis is embarrassingly parallel -> shards across v7x's 2 TCs
            dimension_semantics=("parallel",),
            # default scoped VMEM limit is ample for the tiny footprint
        ),
        cost_estimate=cost,
    )(ids_p, ids_n, lp, ln, s, b2)
    return out[0]


class ScorerBasePallas:
    """JAX/Pallas re-implementation of ScorerBase.forward with a synthetic core."""
    # TODO(synk): GPT2Tokenizer / predict() are host-side string processing with
    # no Pallas equivalent; only the tensor forward pass is implemented.

    def __init__(self, vocab_size=64, hidden=32, key=jax.random.PRNGKey(0)):
        k_emb, k_w, k_b = jax.random.split(key, 3)
        self.embedding = (jax.random.normal(k_emb, (vocab_size, hidden),
                                            dtype=jnp.float32) * 0.02)
        self.w = jax.random.normal(k_w, (1, hidden), dtype=jnp.float32) * 0.1
        self.b = jax.random.normal(k_b, (1, 1), dtype=jnp.float32) * 0.1

    def forward(self, batch):
        return scorer_forward(batch["ids_pos"], batch["ids_neg"],
                              batch["len_pos"], batch["len_neg"],
                              self.embedding, self.w, self.b)

    # Pure-JAX reference for sanity checking (literal spec: exp-ratio form).
    def forward_ref(self, batch):
        def logits(ids, lens):
            x = jnp.take(self.embedding, ids, axis=0)            # [B,T,H]
            T = ids.shape[1]
            mask = (jnp.arange(T)[None, :] < lens[:, None]).astype(jnp.float32)
            denom = jnp.maximum(lens, 1)[:, None].astype(jnp.float32)
            pooled = jnp.sum(x * mask[..., None], axis=1) / denom
            return jnp.sum(pooled * self.w, axis=-1, keepdims=True) + self.b
        lp = logits(batch["ids_pos"], batch["len_pos"])
        ln = logits(batch["ids_neg"], batch["len_neg"])
        return (jnp.exp(lp) / (jnp.exp(lp) + jnp.exp(ln)))[:, 0]


if __name__ == "__main__":
    B, T, H, V = 8, 8, 32, 64
    key = jax.random.PRNGKey(0)
    k_model, k_pos, k_neg, k_lp, k_ln = jax.random.split(key, 5)

    model = ScorerBasePallas(vocab_size=V, hidden=H, key=k_model)

    ids_pos = jax.random.randint(k_pos, (B, T), 0, V, dtype=jnp.int32)
    ids_neg = jax.random.randint(k_neg, (B, T), 0, V, dtype=jnp.int32)
    len_pos = jax.random.randint(k_lp, (B,), 1, T + 1, dtype=jnp.int32)
    len_neg = jax.random.randint(k_ln, (B,), 1, T + 1, dtype=jnp.int32)

    batch = {"ids_pos": ids_pos, "len_pos": len_pos,
             "ids_neg": ids_neg, "len_neg": len_neg}

    out = jax.block_until_ready(model.forward(batch))
    ref = model.forward_ref(batch)

    assert out.shape == (B,), out.shape
    assert jnp.allclose(out, ref, atol=1e-5, rtol=1e-5), (out, ref)

    print("KERNEL_OK")
</pallas_src>

<mosaic_0001>
module attributes {stable_mosaic.version = 11 : i64} {
  func.func @_scorer_kernel(%arg0: i32, %arg1: memref<8x8xi32, #tpu.memory_space<vmem>>, %arg2: memref<8x8xi32, #tpu.memory_space<vmem>>, %arg3: memref<1x8xi32, #tpu.memory_space<vmem>>, %arg4: memref<1x8xi32, #tpu.memory_space<vmem>>, %arg5: memref<64x1xf32, #tpu.memory_space<vmem>>, %arg6: memref<1x1xf32, #tpu.memory_space<vmem>>, %arg7: memref<1x8xf32, #tpu.memory_space<vmem>>) attributes {dimension_semantics = [#tpu.dimension_semantics<parallel>], iteration_bounds = array<i64: 1>, scalar_prefetch = 0 : i64, scratch_operands = 0 : i64, tpu.core_type = #tpu.core_type<tc>, window_params = [{transform_indices = @transform_0, window_bounds = array<i64: 8, 8>}, {transform_indices = @transform_1, window_bounds = array<i64: 8, 8>}, {transform_indices = @transform_2, window_bounds = array<i64: 1, 8>}, {transform_indices = @transform_3, window_bounds = array<i64: 1, 8>}, {pipeline_mode = #tpu.pipeline_mode<synchronous>, transform_indices = @transform_4, window_bounds = array<i64: 64, 1>}, {pipeline_mode = #tpu.pipeline_mode<synchronous>, transform_indices = @transform_5, window_bounds = array<i64: 1, 1>}, {transform_indices = @transform_6, window_bounds = array<i64: 1, 8>}]} {
    %c0 = arith.constant 0 : index
    %c0_0 = arith.constant 0 : index
    %0 = vector.load %arg3[%c0, %c0_0] : memref<1x8xi32, #tpu.memory_space<vmem>>, vector<1x8xi32>
    %c0_1 = arith.constant 0 : index
    %c0_2 = arith.constant 0 : index
    %1 = vector.load %arg4[%c0_1, %c0_2] : memref<1x8xi32, #tpu.memory_space<vmem>>, vector<1x8xi32>
    %c1_i32 = arith.constant 1 : i32
    %2 = vector.broadcast %c1_i32 : i32 to vector<1x8xi32>
    %3 = arith.maxsi %0, %2 : vector<1x8xi32>
    %4 = arith.sitofp %3 : vector<1x8xi32> to vector<1x8xf32>
    %cst = arith.constant 1.000000e+00 : f32
    %5 = vector.broadcast %cst : f32 to vector<1x8xf32>
    %6 = arith.divf %5, %4 : vector<1x8xf32>
    %c1_i32_3 = arith.constant 1 : i32
    %7 = vector.broadcast %c1_i32_3 : i32 to vector<1x8xi32>
    %8 = arith.maxsi %1, %7 : vector<1x8xi32>
    %9 = arith.sitofp %8 : vector<1x8xi32> to vector<1x8xf32>
    %cst_4 = arith.constant 1.000000e+00 : f32
    %10 = vector.broadcast %cst_4 : f32 to vector<1x8xf32>
    %11 = arith.divf %10, %9 : vector<1x8xf32>
    %12 = tpu.iota {dimensions = array<i32: 0>} : vector<64x8xi32>
    %cst_5 = arith.constant 0.000000e+00 : f32
    %13 = vector.broadcast %cst_5 : f32 to vector<64x8xf32>
    %c0_i32 = arith.constant 0 : i32
    %14 = arith.index_cast %c0_i32 : i32 to index
    %c0_6 = arith.constant 0 : index
    %15 = vector.load %arg1[%14, %c0_6] : memref<8x8xi32, #tpu.memory_space<vmem>>, vector<1x8xi32>
    %16 = arith.index_cast %c0_i32 : i32 to index
    %c0_7 = arith.constant 0 : index
    %17 = vector.load %arg2[%16, %c0_7] : memref<8x8xi32, #tpu.memory_space<vmem>>, vector<1x8xi32>
    %18 = vector.broadcast %c0_i32 : i32 to vector<1x8xi32>
    %19 = arith.cmpi slt, %18, %0 : vector<1x8xi32>
    %cst_8 = arith.constant 0.000000e+00 : f32
    %20 = vector.broadcast %cst_8 : f32 to vector<1x8xf32>
    %21 = arith.select %19, %6, %20 : vector<1x8xi1>, vector<1x8xf32>
    %22 = vector.broadcast %c0_i32 : i32 to vector<1x8xi32>
    %23 = arith.cmpi slt, %22, %1 : vector<1x8xi32>
    %cst_9 = arith.constant 0.000000e+00 : f32
    %24 = vector.broadcast %cst_9 : f32 to vector<1x8xf32>
    %25 = arith.select %23, %11, %24 : vector<1x8xi1>, vector<1x8xf32>
    %26 = vector.broadcast %15 : vector<1x8xi32> to vector<64x8xi32>
    %27 = arith.cmpi eq, %26, %12 : vector<64x8xi32>
    %cst_10 = arith.constant 0.000000e+00 : f32
    %28 = vector.shape_cast %21 : vector<1x8xf32> to vector<1x8xf32>
    %29 = vector.broadcast %28 : vector<1x8xf32> to vector<64x8xf32>
    %30 = vector.broadcast %cst_10 : f32 to vector<64x8xf32>
    %31 = arith.select %27, %29, %30 : vector<64x8xi1>, vector<64x8xf32>
    %32 = arith.addf %13, %31 : vector<64x8xf32>
    %33 = vector.broadcast %17 : vector<1x8xi32> to vector<64x8xi32>
    %34 = arith.cmpi eq, %33, %12 : vector<64x8xi32>
    %cst_11 = arith.constant 0.000000e+00 : f32
    %35 = vector.shape_cast %25 : vector<1x8xf32> to vector<1x8xf32>
    %36 = vector.broadcast %35 : vector<1x8xf32> to vector<64x8xf32>
    %37 = vector.broadcast %cst_11 : f32 to vector<64x8xf32>
    %38 = arith.select %34, %36, %37 : vector<64x8xi1>, vector<64x8xf32>
    %39 = arith.addf %13, %38 : vector<64x8xf32>
    %c1_i32_12 = arith.constant 1 : i32
    %40 = arith.index_cast %c1_i32_12 : i32 to index
    %c0_13 = arith.constant 0 : index
    %41 = vector.load %arg1[%40, %c0_13] : memref<8x8xi32, #tpu.memory_space<vmem>>, vector<1x8xi32>
    %42 = arith.index_cast %c1_i32_12 : i32 to index
    %c0_14 = arith.constant 0 : index
    %43 = vector.load %arg2[%42, %c0_14] : memref<8x8xi32, #tpu.memory_space<vmem>>, vector<1x8xi32>
    %44 = vector.broadcast %c1_i32_12 : i32 to vector<1x8xi32>
    %45 = arith.cmpi slt, %44, %0 : vector<1x8xi32>
    %cst_15 = arith.constant 0.000000e+00 : f32
    %46 = vector.broadcast %cst_15 : f32 to vector<1x8xf32>
    %47 = arith.select %45, %6, %46 : vector<1x8xi1>, vector<1x8xf32>
    %48 = vector.broadcast %c1_i32_12 : i32 to vector<1x8xi32>
    %49 = arith.cmpi slt, %48, %1 : vector<1x8xi32>
    %cst_16 = arith.constant 0.000000e+00 : f32
    %50 = vector.broadcast %cst_16 : f32 to vector<1x8xf32>
    %51 = arith.select %49, %11, %50 : vector<1x8xi1>, vector<1x8xf32>
    %52 = vector.broadcast %41 : vector<1x8xi32> to vector<64x8xi32>
    %53 = arith.cmpi eq, %52, %12 : vector<64x8xi32>
    %cst_17 = arith.constant 0.000000e+00 : f32
    %54 = vector.shape_cast %47 : vector<1x8xf32> to vector<1x8xf32>
    %55 = vector.broadcast %54 : vector<1x8xf32> to vector<64x8xf32>
    %56 = vector.broadcast %cst_17 : f32 to vector<64x8xf32>
    %57 = arith.select %53, %55, %56 : vector<64x8xi1>, vector<64x8xf32>
    %58 = arith.addf %32, %57 : vector<64x8xf32>
    %59 = vector.broadcast %43 : vector<1x8xi32> to vector<64x8xi32>
    %60 = arith.cmpi eq, %59, %12 : vector<64x8xi32>
    %cst_18 = arith.constant 0.000000e+00 : f32
    %61 = vector.shape_cast %51 : vector<1x8xf32> to vector<1x8xf32>
    %62 = vector.broadcast %61 : vector<1x8xf32> to vector<64x8xf32>
    %63 = vector.broadcast %cst_18 : f32 to vector<64x8xf32>
    %64 = arith.select %60, %62, %63 : vector<64x8xi1>, vector<64x8xf32>
    %65 = arith.addf %39, %64 : vector<64x8xf32>
    %c2_i32 = arith.constant 2 : i32
    %66 = arith.index_cast %c2_i32 : i32 to index
    %c0_19 = arith.constant 0 : index
    %67 = vector.load %arg1[%66, %c0_19] : memref<8x8xi32, #tpu.memory_space<vmem>>, vector<1x8xi32>
    %68 = arith.index_cast %c2_i32 : i32 to index
    %c0_20 = arith.constant 0 : index
    %69 = vector.load %arg2[%68, %c0_20] : memref<8x8xi32, #tpu.memory_space<vmem>>, vector<1x8xi32>
    %70 = vector.broadcast %c2_i32 : i32 to vector<1x8xi32>
    %71 = arith.cmpi slt, %70, %0 : vector<1x8xi32>
    %cst_21 = arith.constant 0.000000e+00 : f32
    %72 = vector.broadcast %cst_21 : f32 to vector<1x8xf32>
    %73 = arith.select %71, %6, %72 : vector<1x8xi1>, vector<1x8xf32>
    %74 = vector.broadcast %c2_i32 : i32 to vector<1x8xi32>
    %75 = arith.cmpi slt, %74, %1 : vector<1x8xi32>
    %cst_22 = arith.constant 0.000000e+00 : f32
    %76 = vector.broadcast %cst_22 : f32 to vector<1x8xf32>
    %77 = arith.select %75, %11, %76 : vector<1x8xi1>, vector<1x8xf32>
    %78 = vector.broadcast %67 : vector<1x8xi32> to vector<64x8xi32>
    %79 = arith.cmpi eq, %78, %12 : vector<64x8xi32>
    %cst_23 = arith.constant 0.000000e+00 : f32
    %80 = vector.shape_cast %73 : vector<1x8xf32> to vector<1x8xf32>
    %81 = vector.broadcast %80 : vector<1x8xf32> to vector<64x8xf32>
    %82 = vector.broadcast %cst_23 : f32 to vector<64x8xf32>
    %83 = arith.select %79, %81, %82 : vector<64x8xi1>, vector<64x8xf32>
    %84 = arith.addf %58, %83 : vector<64x8xf32>
    %85 = vector.broadcast %69 : vector<1x8xi32> to vector<64x8xi32>
    %86 = arith.cmpi eq, %85, %12 : vector<64x8xi32>
    %cst_24 = arith.constant 0.000000e+00 : f32
    %87 = vector.shape_cast %77 : vector<1x8xf32> to vector<1x8xf32>
    %88 = vector.broadcast %87 : vector<1x8xf32> to vector<64x8xf32>
    %89 = vector.broadcast %cst_24 : f32 to vector<64x8xf32>
    %90 = arith.select %86, %88, %89 : vector<64x8xi1>, vector<64x8xf32>
    %91 = arith.addf %65, %90 : vector<64x8xf32>
    %c3_i32 = arith.constant 3 : i32
    %92 = arith.index_cast %c3_i32 : i32 to index
    %c0_25 = arith.constant 0 : index
    %93 = vector.load %arg1[%92, %c0_25] : memref<8x8xi32, #tpu.memory_space<vmem>>, vector<1x8xi32>
    %94 = arith.index_cast %c3_i32 : i32 to index
    %c0_26 = arith.constant 0 : index
    %95 = vector.load %arg2[%94, %c0_26] : memref<8x8xi32, #tpu.memory_space<vmem>>, vector<1x8xi32>
    %96 = vector.broadcast %c3_i32 : i32 to vector<1x8xi32>
    %97 = arith.cmpi slt, %96, %0 : vector<1x8xi32>
    %cst_27 = arith.constant 0.000000e+00 : f32
    %98 = vector.broadcast %cst_27 : f32 to vector<1x8xf32>
    %99 = arith.select %97, %6, %98 : vector<1x8xi1>, vector<1x8xf32>
    %100 = vector.broadcast %c3_i32 : i32 to vector<1x8xi32>
    %101 = arith.cmpi slt, %100, %1 : vector<1x8xi32>
    %cst_28 = arith.constant 0.000000e+00 : f32
    %102 = vector.broadcast %cst_28 : f32 to vector<1x8xf32>
    %103 = arith.select %101, %11, %102 : vector<1x8xi1>, vector<1x8xf32>
    %104 = vector.broadcast %93 : vector<1x8xi32> to vector<64x8xi32>
    %105 = arith.cmpi eq, %104, %12 : vector<64x8xi32>
    %cst_29 = arith.constant 0.000000e+00 : f32
    %106 = vector.shape_cast %99 : vector<1x8xf32> to vector<1x8xf32>
    %107 = vector.broadcast %106 : vector<1x8xf32> to vector<64x8xf32>
    %108 = vector.broadcast %cst_29 : f32 to vector<64x8xf32>
    %109 = arith.select %105, %107, %108 : vector<64x8xi1>, vector<64x8xf32>
    %110 = arith.addf %84, %109 : vector<64x8xf32>
    %111 = vector.broadcast %95 : vector<1x8xi32> to vector<64x8xi32>
    %112 = arith.cmpi eq, %111, %12 : vector<64x8xi32>
    %cst_30 = arith.constant 0.000000e+00 : f32
    %113 = vector.shape_cast %103 : vector<1x8xf32> to vector<1x8xf32>
    %114 = vector.broadcast %113 : vector<1x8xf32> to vector<64x8xf32>
    %115 = vector.broadcast %cst_30 : f32 to vector<64x8xf32>
    %116 = arith.select %112, %114, %115 : vector<64x8xi1>, vector<64x8xf32>
    %117 = arith.addf %91, %116 : vector<64x8xf32>
    %c4_i32 = arith.constant 4 : i32
    %118 = arith.index_cast %c4_i32 : i32 to index
    %c0_31 = arith.constant 0 : index
    %119 = vector.load %arg1[%118, %c0_31] : memref<8x8xi32, #tpu.memory_space<vmem>>, vector<1x8xi32>
    %120 = arith.index_cast %c4_i32 : i32 to index
    %c0_32 = arith.constant 0 : index
    %121 = vector.load %arg2[%120, %c0_32] : memref<8x8xi32, #tpu.memory_space<vmem>>, vector<1x8xi32>
    %122 = vector.broadcast %c4_i32 : i32 to vector<1x8xi32>
    %123 = arith.cmpi slt, %122, %0 : vector<1x8xi32>
    %cst_33 = arith.constant 0.000000e+00 : f32
    %124 = vector.broadcast %cst_33 : f32 to vector<1x8xf32>
    %125 = arith.select %123, %6, %124 : vector<1x8xi1>, vector<1x8xf32>
    %126 = vector.broadcast %c4_i32 : i32 to vector<1x8xi32>
    %127 = arith.cmpi slt, %126, %1 : vector<1x8xi32>
    %cst_34 = arith.constant 0.000000e+00 : f32
    %128 = vector.broadcast %cst_34 : f32 to vector<1x8xf32>
    %129 = arith.select %127, %11, %128 : vector<1x8xi1>, vector<1x8xf32>
    %130 = vector.broadcast %119 : vector<1x8xi32> to vector<64x8xi32>
    %131 = arith.cmpi eq, %130, %12 : vector<64x8xi32>
    %cst_35 = arith.constant 0.000000e+00 : f32
    %132 = vector.shape_cast %125 : vector<1x8xf32> to vector<1x8xf32>
    %133 = vector.broadcast %132 : vector<1x8xf32> to vector<64x8xf32>
    %134 = vector.broadcast %cst_35 : f32 to vector<64x8xf32>
    %135 = arith.select %131, %133, %134 : vector<64x8xi1>, vector<64x8xf32>
    %136 = arith.addf %110, %135 : vector<64x8xf32>
    %137 = vector.broadcast %121 : vector<1x8xi32> to vector<64x8xi32>
    %138 = arith.cmpi eq, %137, %12 : vector<64x8xi32>
    %cst_36 = arith.constant 0.000000e+00 : f32
    %139 = vector.shape_cast %129 : vector<1x8xf32> to vector<1x8xf32>
    %140 = vector.broadcast %139 : vector<1x8xf32> to vector<64x8xf32>
    %141 = vector.broadcast %cst_36 : f32 to vector<64x8xf32>
    %142 = arith.select %138, %140, %141 : vector<64x8xi1>, vector<64x8xf32>
    %143 = arith.addf %117, %142 : vector<64x8xf32>
    %c5_i32 = arith.constant 5 : i32
    %144 = arith.index_cast %c5_i32 : i32 to index
    %c0_37 = arith.constant 0 : index
    %145 = vector.load %arg1[%144, %c0_37] : memref<8x8xi32, #tpu.memory_space<vmem>>, vector<1x8xi32>
    %146 = arith.index_cast %c5_i32 : i32 to index
    %c0_38 = arith.constant 0 : index
    %147 = vector.load %arg2[%146, %c0_38] : memref<8x8xi32, #tpu.memory_space<vmem>>, vector<1x8xi32>
    %148 = vector.broadcast %c5_i32 : i32 to vector<1x8xi32>
    %149 = arith.cmpi slt, %148, %0 : vector<1x8xi32>
    %cst_39 = arith.constant 0.000000e+00 : f32
    %150 = vector.broadcast %cst_39 : f32 to vector<1x8xf32>
    %151 = arith.select %149, %6, %150 : vector<1x8xi1>, vector<1x8xf32>
    %152 = vector.broadcast %c5_i32 : i32 to vector<1x8xi32>
    %153 = arith.cmpi slt, %152, %1 : vector<1x8xi32>
    %cst_40 = arith.constant 0.000000e+00 : f32
    %154 = vector.broadcast %cst_40 : f32 to vector<1x8xf32>
    %155 = arith.select %153, %11, %154 : vector<1x8xi1>, vector<1x8xf32>
    %156 = vector.broadcast %145 : vector<1x8xi32> to vector<64x8xi32>
    %157 = arith.cmpi eq, %156, %12 : vector<64x8xi32>
    %cst_41 = arith.constant 0.000000e+00 : f32
    %158 = vector.shape_cast %151 : vector<1x8xf32> to vector<1x8xf32>
    %159 = vector.broadcast %158 : vector<1x8xf32> to vector<64x8xf32>
    %160 = vector.broadcast %cst_41 : f32 to vector<64x8xf32>
    %161 = arith.select %157, %159, %160 : vector<64x8xi1>, vector<64x8xf32>
    %162 = arith.addf %136, %161 : vector<64x8xf32>
    %163 = vector.broadcast %147 : vector<1x8xi32> to vector<64x8xi32>
    %164 = arith.cmpi eq, %163, %12 : vector<64x8xi32>
    %cst_42 = arith.constant 0.000000e+00 : f32
    %165 = vector.shape_cast %155 : vector<1x8xf32> to vector<1x8xf32>
    %166 = vector.broadcast %165 : vector<1x8xf32> to vector<64x8xf32>
    %167 = vector.broadcast %cst_42 : f32 to vector<64x8xf32>
    %168 = arith.select %164, %166, %167 : vector<64x8xi1>, vector<64x8xf32>
    %169 = arith.addf %143, %168 : vector<64x8xf32>
    %c6_i32 = arith.constant 6 : i32
    %170 = arith.index_cast %c6_i32 : i32 to index
    %c0_43 = arith.constant 0 : index
    %171 = vector.load %arg1[%170, %c0_43] : memref<8x8xi32, #tpu.memory_space<vmem>>, vector<1x8xi32>
    %172 = arith.index_cast %c6_i32 : i32 to index
    %c0_44 = arith.constant 0 : index
    %173 = vector.load %arg2[%172, %c0_44] : memref<8x8xi32, #tpu.memory_space<vmem>>, vector<1x8xi32>
    %174 = vector.broadcast %c6_i32 : i32 to vector<1x8xi32>
    %175 = arith.cmpi slt, %174, %0 : vector<1x8xi32>
    %cst_45 = arith.constant 0.000000e+00 : f32
    %176 = vector.broadcast %cst_45 : f32 to vector<1x8xf32>
    %177 = arith.select %175, %6, %176 : vector<1x8xi1>, vector<1x8xf32>
    %178 = vector.broadcast %c6_i32 : i32 to vector<1x8xi32>
    %179 = arith.cmpi slt, %178, %1 : vector<1x8xi32>
    %cst_46 = arith.constant 0.000000e+00 : f32
    %180 = vector.broadcast %cst_46 : f32 to vector<1x8xf32>
    %181 = arith.select %179, %11, %180 : vector<1x8xi1>, vector<1x8xf32>
    %182 = vector.broadcast %171 : vector<1x8xi32> to vector<64x8xi32>
    %183 = arith.cmpi eq, %182, %12 : vector<64x8xi32>
    %cst_47 = arith.constant 0.000000e+00 : f32
    %184 = vector.shape_cast %177 : vector<1x8xf32> to vector<1x8xf32>
    %185 = vector.broadcast %184 : vector<1x8xf32> to vector<64x8xf32>
    %186 = vector.broadcast %cst_47 : f32 to vector<64x8xf32>
    %187 = arith.select %183, %185, %186 : vector<64x8xi1>, vector<64x8xf32>
    %188 = arith.addf %162, %187 : vector<64x8xf32>
    %189 = vector.broadcast %173 : vector<1x8xi32> to vector<64x8xi32>
    %190 = arith.cmpi eq, %189, %12 : vector<64x8xi32>
    %cst_48 = arith.constant 0.000000e+00 : f32
    %191 = vector.shape_cast %181 : vector<1x8xf32> to vector<1x8xf32>
    %192 = vector.broadcast %191 : vector<1x8xf32> to vector<64x8xf32>
    %193 = vector.broadcast %cst_48 : f32 to vector<64x8xf32>
    %194 = arith.select %190, %192, %193 : vector<64x8xi1>, vector<64x8xf32>
    %195 = arith.addf %169, %194 : vector<64x8xf32>
    %c7_i32 = arith.constant 7 : i32
    %196 = arith.index_cast %c7_i32 : i32 to index
    %c0_49 = arith.constant 0 : index
    %197 = vector.load %arg1[%196, %c0_49] : memref<8x8xi32, #tpu.memory_space<vmem>>, vector<1x8xi32>
    %198 = arith.index_cast %c7_i32 : i32 to index
    %c0_50 = arith.constant 0 : index
    %199 = vector.load %arg2[%198, %c0_50] : memref<8x8xi32, #tpu.memory_space<vmem>>, vector<1x8xi32>
    %200 = vector.broadcast %c7_i32 : i32 to vector<1x8xi32>
    %201 = arith.cmpi slt, %200, %0 : vector<1x8xi32>
    %cst_51 = arith.constant 0.000000e+00 : f32
    %202 = vector.broadcast %cst_51 : f32 to vector<1x8xf32>
    %203 = arith.select %201, %6, %202 : vector<1x8xi1>, vector<1x8xf32>
    %204 = vector.broadcast %c7_i32 : i32 to vector<1x8xi32>
    %205 = arith.cmpi slt, %204, %1 : vector<1x8xi32>
    %cst_52 = arith.constant 0.000000e+00 : f32
    %206 = vector.broadcast %cst_52 : f32 to vector<1x8xf32>
    %207 = arith.select %205, %11, %206 : vector<1x8xi1>, vector<1x8xf32>
    %208 = vector.broadcast %197 : vector<1x8xi32> to vector<64x8xi32>
    %209 = arith.cmpi eq, %208, %12 : vector<64x8xi32>
    %cst_53 = arith.constant 0.000000e+00 : f32
    %210 = vector.shape_cast %203 : vector<1x8xf32> to vector<1x8xf32>
    %211 = vector.broadcast %210 : vector<1x8xf32> to vector<64x8xf32>
    %212 = vector.broadcast %cst_53 : f32 to vector<64x8xf32>
    %213 = arith.select %209, %211, %212 : vector<64x8xi1>, vector<64x8xf32>
    %214 = arith.addf %188, %213 : vector<64x8xf32>
    %215 = vector.broadcast %199 : vector<1x8xi32> to vector<64x8xi32>
    %216 = arith.cmpi eq, %215, %12 : vector<64x8xi32>
    %cst_54 = arith.constant 0.000000e+00 : f32
    %217 = vector.shape_cast %207 : vector<1x8xf32> to vector<1x8xf32>
    %218 = vector.broadcast %217 : vector<1x8xf32> to vector<64x8xf32>
    %219 = vector.broadcast %cst_54 : f32 to vector<64x8xf32>
    %220 = arith.select %216, %218, %219 : vector<64x8xi1>, vector<64x8xf32>
    %221 = arith.addf %195, %220 : vector<64x8xf32>
    %c8_i32 = arith.constant 8 : i32
    %c0_55 = arith.constant 0 : index
    %c0_56 = arith.constant 0 : index
    %222 = vector.load %arg5[%c0_55, %c0_56] : memref<64x1xf32, #tpu.memory_space<vmem>>, vector<64x1xf32>
    %c0_57 = arith.constant 0 : index
    %c0_58 = arith.constant 0 : index
    %223 = vector.load %arg6[%c0_57, %c0_58] : memref<1x1xf32, #tpu.memory_space<vmem>>, vector<1x1xf32>
    %224 = vector.broadcast %222 : vector<64x1xf32> to vector<64x8xf32>
    %225 = arith.mulf %214, %224 : vector<64x8xf32>
    %cst_59 = arith.constant dense<0.000000e+00> : vector<8xf32>
    %226 = vector.multi_reduction <add>, %225, %cst_59 [0] : vector<64x8xf32> to vector<8xf32>
    %227 = vector.shape_cast %226 : vector<8xf32> to vector<1x8xf32>
    %228 = vector.broadcast %223 : vector<1x1xf32> to vector<1x8xf32>
    %229 = arith.addf %227, %228 : vector<1x8xf32>
    %230 = vector.broadcast %222 : vector<64x1xf32> to vector<64x8xf32>
    %231 = arith.mulf %221, %230 : vector<64x8xf32>
    %cst_60 = arith.constant dense<0.000000e+00> : vector<8xf32>
    %232 = vector.multi_reduction <add>, %231, %cst_60 [0] : vector<64x8xf32> to vector<8xf32>
    %233 = vector.shape_cast %232 : vector<8xf32> to vector<1x8xf32>
    %234 = vector.broadcast %223 : vector<1x1xf32> to vector<1x8xf32>
    %235 = arith.addf %233, %234 : vector<1x8xf32>
    %236 = arith.subf %235, %229 : vector<1x8xf32>
    %237 = math.exp %236 : vector<1x8xf32>
    %cst_61 = arith.constant 1.000000e+00 : f32
    %238 = vector.broadcast %cst_61 : f32 to vector<1x8xf32>
    %239 = arith.addf %238, %237 : vector<1x8xf32>
    %cst_62 = arith.constant 1.000000e+00 : f32
    %240 = vector.broadcast %cst_62 : f32 to vector<1x8xf32>
    %241 = arith.divf %240, %239 : vector<1x8xf32>
    %c0_63 = arith.constant 0 : index
    %c0_64 = arith.constant 0 : index
    %242 = vector.load %arg7[%c0_63, %c0_64] : memref<1x8xf32, #tpu.memory_space<vmem>>, vector<1x8xf32>
    tpu.vector_store %arg7[%c0_63, %c0_64], %241 {strides = array<i32>} : memref<1x8xf32, #tpu.memory_space<vmem>>, vector<1x8xf32>,
    return
  }
  func.func @transform_0(%arg0: i32) -> (i32, i32) {
    %c0_i32 = arith.constant 0 : i32
    %c0_i32_0 = arith.constant 0 : i32
    return %c0_i32, %arg0 : i32, i32
  }
  func.func @transform_1(%arg0: i32) -> (i32, i32) {
    %c0_i32 = arith.constant 0 : i32
    %c0_i32_0 = arith.constant 0 : i32
    return %c0_i32, %arg0 : i32, i32
  }
  func.func @transform_2(%arg0: i32) -> (i32, i32) {
    %c0_i32 = arith.constant 0 : i32
    %c0_i32_0 = arith.constant 0 : i32
    return %c0_i32, %arg0 : i32, i32
  }
  func.func @transform_3(%arg0: i32) -> (i32, i32) {
    %c0_i32 = arith.constant 0 : i32
    %c0_i32_0 = arith.constant 0 : i32
    return %c0_i32, %arg0 : i32, i32
  }
  func.func @transform_4(%arg0: i32) -> (i32, i32) {
    %c0_i32 = arith.constant 0 : i32
    %c0_i32_0 = arith.constant 0 : i32
    %c0_i32_1 = arith.constant 0 : i32
    return %c0_i32, %c0_i32_0 : i32, i32
  }
  func.func @transform_5(%arg0: i32) -> (i32, i32) {
    %c0_i32 = arith.constant 0 : i32
    %c0_i32_0 = arith.constant 0 : i32
    %c0_i32_1 = arith.constant 0 : i32
    return %c0_i32, %c0_i32_0 : i32, i32
  }
  func.func @transform_6(%arg0: i32) -> (i32, i32) {
    %c0_i32 = arith.constant 0 : i32
    %c0_i32_0 = arith.constant 0 : i32
    return %c0_i32, %arg0 : i32, i32
  }
}

</mosaic_0001>

<llo_original>
// kernel: tpu_custom_call.1
$region0: #{tpu_custom_call.1}
  #allocation0 [shape = 'u32[]', space=smem, size = 0x4, offset = 0x4, fixed_abs, tag = 'smem constant byte address 0x4 - core index']
  #allocation1 [shape = 'u32[144,128]{1,0:T(1,128)}', space=vmem, size = 0x12000, scoped, tag = 'internal scratch']
  #allocation2 [shape = 'f32[1,1]{1,0:T(1,128)S(1)}', space=vmem, size = 0x200, scoped, tag = 'scoped memory for tpu_custom_call.1']
  %s0 = inlined_call_operand.vmem [shape: s32[8,8], index: 0, kind: input, shape index: {}]
  %s1 = inlined_call_operand.vmem [shape: s32[8,8], index: 1, kind: input, shape index: {}]
  %s2 = inlined_call_operand.vmem [shape: s32[1,8], index: 2, kind: input, shape index: {}]
  %s3 = inlined_call_operand.vmem [shape: s32[1,8], index: 3, kind: input, shape index: {}]
  %s4 = inlined_call_operand.vmem [shape: f32[64,1], index: 4, kind: input, shape index: {}]
  %s5 = inlined_call_operand.<no memory space> [shape: f32[1,1], index: 5, kind: input, shape index: {}]
  %s6 = inlined_call_operand.hbm [shape: f32[1,8], index: 6, kind: output, shape index: {}]
  %s7 = sld [smem:[#allocation0]]
  $region34: #{tpu_custom_call.1} parent=0
    _
  %s9 = ssub.s32 1, %s7
  %s10 = scalar_select 0, %s9, %s7
  %v11 = vstv %s5
  %12 = vst [vmem:[#allocation2] sm:$0x1] %v11
  $region1: #{tpu_custom_call.1} parent=0
    #allocation3 [shape = 'u8[512]{0}', space=vmem, size = 0x400, scoped, tag = 'output window, operand 0, single buffered']
    #allocation4 [shape = 's32[1]{0}', space=sflag, size = 0x4, scoped, tag = 'scoped memory for tpu_custom_call.1']
    %13 = vsyncpa [#allocation4], 0
    // Predicated region
    $region2: #{tpu_custom_call.1} parent=1 // pred_check
      _
    $region3: #{tpu_custom_call.1} parent=1 // pred_check_branch
      %15 = sbr.rel (0) target = $region5
    $region4: #{tpu_custom_call.1} parent=1 // pred_region
      _
    $region5: #{tpu_custom_call.1} parent=1 // pred_fallthru
      _
    // Predicated region
    $region6: #{tpu_custom_call.1} parent=1 // pred_check
      _
    $region7: #{tpu_custom_call.1} parent=1 // pred_check_branch
      %17 = sbr.rel (0) target = $region9
    $region8: #{tpu_custom_call.1} parent=1 // pred_region
      _
    $region9: #{tpu_custom_call.1} parent=1 // pred_fallthru
      _
    // Predicated region
    $region10: #{tpu_custom_call.1} parent=1 // pred_check
      _
    $region11: #{tpu_custom_call.1} parent=1 // pred_check_branch
      %19 = sbr.rel (0) target = $region13
    $region12: #{tpu_custom_call.1} parent=1 // pred_region
      _
    $region13: #{tpu_custom_call.1} parent=1 // pred_fallthru
      _
    // Predicated region
    $region14: #{tpu_custom_call.1} parent=1 // pred_check
      _
    $region15: #{tpu_custom_call.1} parent=1 // pred_check_branch
      %21 = sbr.rel (0) target = $region17
    $region16: #{tpu_custom_call.1} parent=1 // pred_region
      _
    $region17: #{tpu_custom_call.1} parent=1 // pred_fallthru
      _
    // Predicated region
    $region18: #{tpu_custom_call.1} parent=1 // pred_check
      _
    $region19: #{tpu_custom_call.1} parent=1 // pred_check_branch
      %23 = sbr.rel (0) target = $region21
    $region20: #{tpu_custom_call.1} parent=1 // pred_region
      _
    $region21: #{tpu_custom_call.1} parent=1 // pred_fallthru
      _
    // Predicated region
    $region22: #{tpu_custom_call.1} parent=1 // pred_check
      _
    $region23: #{tpu_custom_call.1} parent=1 // pred_check_branch
      %25 = sbr.rel (0) target = $region25
    $region24: #{tpu_custom_call.1} parent=1 // pred_region
      _
    $region25: #{tpu_custom_call.1} parent=1 // pred_fallthru
      _
    %v26 = vld [vmem:[%s2] sm:$0x1]
    %v27 = vld [vmem:[%s3] sm:$0x1]
    %vm28 = vcmp.gt.s32.totalorder %v26, 1
    %v29 = vsel %vm28, %v26, 1
    %v30 = vcvt.s32.f32 %v29
    %v31 = vrcp.pop %v30
    %v32 = vmul.f32 1.0, %v31
    %vm33 = vcmp.gt.s32.totalorder %v27, 1
    %v34 = vsel %vm33, %v27, 1
    %v35 = vcvt.s32.f32 %v34
    %v36 = vrcp.pop %v35
    %v37 = vmul.f32 1.0, %v36
    %v38 = vlaneseq
    %v39 = vshrl.u32 %v38, 7
    %v40 = vadd.s32 %v39, 8
    %v41 = vadd.s32 %v39, 16
    %v42 = vadd.s32 %v39, 24
    %v43 = vadd.s32 %v39, 32
    %v44 = vadd.s32 %v39, 40
    %v45 = vadd.s32 %v39, 48
    %v46 = vadd.s32 %v39, 56
    %v47 = vld [vmem:[%s0] sm:$0x1]
    %v48 = vld [vmem:[%s1] sm:$0x1]
    %vm49 = vcmp.gt.s32.totalorder %v26, 0
    %v50 = vsel %vm49, %v32, 0.0
    %vm51 = vcmp.gt.s32.totalorder %v27, 0
    %v52 = vsel %vm51, %v37, 0.0
    %v53 = vlaneseq
    %v54 = vshrl.u32 %v53, 7
    %v55 = vsub.s32 0, %v54
    %v56 = vrot.slane %v47, %v55
    %vm57 = vcmp.eq.s32.totalorder %v56, %v39
    %vm58 = vcmp.eq.s32.totalorder %v56, %v40
    %vm59 = vcmp.eq.s32.totalorder %v56, %v41
    %vm60 = vcmp.eq.s32.totalorder %v56, %v42
    %vm61 = vcmp.eq.s32.totalorder %v56, %v43
    %vm62 = vcmp.eq.s32.totalorder %v56, %v44
    %vm63 = vcmp.eq.s32.totalorder %v56, %v45
    %vm64 = vcmp.eq.s32.totalorder %v56, %v46
    %v66 = vlaneseq
    %v67 = vshrl.u32 %v66, 7
    %v68 = vsub.s32 0, %v67
    %v69 = vrot.slane %v50, %v68
    %v71 = vsel %vm57, %v69, 0.0
    %v72 = vsel %vm58, %v69, 0.0
    %v73 = vsel %vm59, %v69, 0.0
    %v74 = vsel %vm60, %v69, 0.0
    %v75 = vsel %vm61, %v69, 0.0
    %v76 = vsel %vm62, %v69, 0.0
    %v77 = vsel %vm63, %v69, 0.0
    %v78 = vsel %vm64, %v69, 0.0
    %v79 = vadd.f32 %v71, 0.0
    %v80 = vadd.f32 %v72, 0.0
    %v81 = vadd.f32 %v73, 0.0
    %v82 = vadd.f32 %v74, 0.0
    %v83 = vadd.f32 %v75, 0.0
    %v84 = vadd.f32 %v76, 0.0
    %v85 = vadd.f32 %v77, 0.0
    %v86 = vadd.f32 %v78, 0.0
    %v87 = vlaneseq
    %v88 = vshrl.u32 %v87, 7
    %v89 = vsub.s32 0, %v88
    %v90 = vrot.slane %v48, %v89
    %vm91 = vcmp.eq.s32.totalorder %v90, %v39
    %vm92 = vcmp.eq.s32.totalorder %v90, %v40
    %vm93 = vcmp.eq.s32.totalorder %v90, %v41
    %vm94 = vcmp.eq.s32.totalorder %v90, %v42
    %vm95 = vcmp.eq.s32.totalorder %v90, %v43
    %vm96 = vcmp.eq.s32.totalorder %v90, %v44
    %vm97 = vcmp.eq.s32.totalorder %v90, %v45
    %vm98 = vcmp.eq.s32.totalorder %v90, %v46
    %v100 = vlaneseq
    %v101 = vshrl.u32 %v100, 7
    %v102 = vsub.s32 0, %v101
    %v103 = vrot.slane %v52, %v102
    %v105 = vsel %vm91, %v103, 0.0
    %v106 = vsel %vm92, %v103, 0.0
    %v107 = vsel %vm93, %v103, 0.0
    %v108 = vsel %vm94, %v103, 0.0
    %v109 = vsel %vm95, %v103, 0.0
    %v110 = vsel %vm96, %v103, 0.0
    %v111 = vsel %vm97, %v103, 0.0
    %v112 = vsel %vm98, %v103, 0.0
    %v113 = vadd.f32 %v105, 0.0
    %v114 = vadd.f32 %v106, 0.0
    %v115 = vadd.f32 %v107, 0.0
    %v116 = vadd.f32 %v108, 0.0
    %v117 = vadd.f32 %v109, 0.0
    %v118 = vadd.f32 %v110, 0.0
    %v119 = vadd.f32 %v111, 0.0
    %v120 = vadd.f32 %v112, 0.0
    %v121 = vld [vmem:[%s0 + $0x1] sm:$0x1]
    %v122 = vld [vmem:[%s1 + $0x1] sm:$0x1]
    %vm123 = vcmp.gt.s32.totalorder %v26, 1
    %v124 = vsel %vm123, %v32, 0.0
    %vm125 = vcmp.gt.s32.totalorder %v27, 1
    %v126 = vsel %vm125, %v37, 0.0
    %v127 = vlaneseq
    %v128 = vshrl.u32 %v127, 7
    %v129 = vsub.s32 0, %v128
    %v130 = vrot.slane %v121, %v129
    %vm131 = vcmp.eq.s32.totalorder %v130, %v39
    %vm132 = vcmp.eq.s32.totalorder %v130, %v40
    %vm133 = vcmp.eq.s32.totalorder %v130, %v41
    %vm134 = vcmp.eq.s32.totalorder %v130, %v42
    %vm135 = vcmp.eq.s32.totalorder %v130, %v43
    %vm136 = vcmp.eq.s32.totalorder %v130, %v44
    %vm137 = vcmp.eq.s32.totalorder %v130, %v45
    %vm138 = vcmp.eq.s32.totalorder %v130, %v46
    %v140 = vlaneseq
    %v141 = vshrl.u32 %v140, 7
    %v142 = vsub.s32 0, %v141
    %v143 = vrot.slane %v124, %v142
    %v145 = vsel %vm131, %v143, 0.0
    %v146 = vsel %vm132, %v143, 0.0
    %v147 = vsel %vm133, %v143, 0.0
    %v148 = vsel %vm134, %v143, 0.0
    %v149 = vsel %vm135, %v143, 0.0
    %v150 = vsel %vm136, %v143, 0.0
    %v151 = vsel %vm137, %v143, 0.0
    %v152 = vsel %vm138, %v143, 0.0
    %v153 = vadd.f32 %v79, %v145
    %v154 = vadd.f32 %v80, %v146
    %v155 = vadd.f32 %v81, %v147
    %v156 = vadd.f32 %v82, %v148
    %v157 = vadd.f32 %v83, %v149
    %v158 = vadd.f32 %v84, %v150
    %v159 = vadd.f32 %v85, %v151
    %v160 = vadd.f32 %v86, %v152
    %v161 = vlaneseq
    %v162 = vshrl.u32 %v161, 7
    %v163 = vsub.s32 0, %v162
    %v164 = vrot.slane %v122, %v163
    %vm165 = vcmp.eq.s32.totalorder %v164, %v39
    %vm166 = vcmp.eq.s32.totalorder %v164, %v40
    %vm167 = vcmp.eq.s32.totalorder %v164, %v41
    %vm168 = vcmp.eq.s32.totalorder %v164, %v42
    %vm169 = vcmp.eq.s32.totalorder %v164, %v43
    %vm170 = vcmp.eq.s32.totalorder %v164, %v44
    %vm171 = vcmp.eq.s32.totalorder %v164, %v45
    %vm172 = vcmp.eq.s32.totalorder %v164, %v46
    %v174 = vlaneseq
    %v175 = vshrl.u32 %v174, 7
    %v176 = vsub.s32 0, %v175
    %v177 = vrot.slane %v126, %v176
    %v179 = vsel %vm165, %v177, 0.0
    %v180 = vsel %vm166, %v177, 0.0
    %v181 = vsel %vm167, %v177, 0.0
    %v182 = vsel %vm168, %v177, 0.0
    %v183 = vsel %vm169, %v177, 0.0
    %v184 = vsel %vm170, %v177, 0.0
    %v185 = vsel %vm171, %v177, 0.0
    %v186 = vsel %vm172, %v177, 0.0
    %v187 = vadd.f32 %v113, %v179
    %v188 = vadd.f32 %v114, %v180
    %v189 = vadd.f32 %v115, %v181
    %v190 = vadd.f32 %v116, %v182
    %v191 = vadd.f32 %v117, %v183
    %v192 = vadd.f32 %v118, %v184
    %v193 = vadd.f32 %v119, %v185
    %v194 = vadd.f32 %v120, %v186
    %v195 = vld [vmem:[%s0 + $0x2] sm:$0x1]
    %v196 = vld [vmem:[%s1 + $0x2] sm:$0x1]
    %vm197 = vcmp.gt.s32.totalorder %v26, 2
    %v198 = vsel %vm197, %v32, 0.0
    %vm199 = vcmp.gt.s32.totalorder %v27, 2
    %v200 = vsel %vm199, %v37, 0.0
    %v201 = vlaneseq
    %v202 = vshrl.u32 %v201, 7
    %v203 = vsub.s32 0, %v202
    %v204 = vrot.slane %v195, %v203
    %vm205 = vcmp.eq.s32.totalorder %v204, %v39
    %vm206 = vcmp.eq.s32.totalorder %v204, %v40
    %vm207 = vcmp.eq.s32.totalorder %v204, %v41
    %vm208 = vcmp.eq.s32.totalorder %v204, %v42
    %vm209 = vcmp.eq.s32.totalorder %v204, %v43
    %vm210 = vcmp.eq.s32.totalorder %v204, %v44
    %vm211 = vcmp.eq.s32.totalorder %v204, %v45
    %vm212 = vcmp.eq.s32.totalorder %v204, %v46
    %v214 = vlaneseq
    %v215 = vshrl.u32 %v214, 7
    %v216 = vsub.s32 0, %v215
    %v217 = vrot.slane %v198, %v216
    %v219 = vsel %vm205, %v217, 0.0
    %v220 = vsel %vm206, %v217, 0.0
    %v221 = vsel %vm207, %v217, 0.0
    %v222 = vsel %vm208, %v217, 0.0
    %v223 = vsel %vm209, %v217, 0.0
    %v224 = vsel %vm210, %v217, 0.0
    %v225 = vsel %vm211, %v217, 0.0
    %v226 = vsel %vm212, %v217, 0.0
    %v227 = vadd.f32 %v153, %v219
    %v228 = vadd.f32 %v154, %v220
    %v229 = vadd.f32 %v155, %v221
    %v230 = vadd.f32 %v156, %v222
    %v231 = vadd.f32 %v157, %v223
    %v232 = vadd.f32 %v158, %v224
    %v233 = vadd.f32 %v159, %v225
    %v234 = vadd.f32 %v160, %v226
    %v235 = vlaneseq
    %v236 = vshrl.u32 %v235, 7
    %v237 = vsub.s32 0, %v236
    %v238 = vrot.slane %v196, %v237
    %vm239 = vcmp.eq.s32.totalorder %v238, %v39
    %vm240 = vcmp.eq.s32.totalorder %v238, %v40
    %vm241 = vcmp.eq.s32.totalorder %v238, %v41
    %vm242 = vcmp.eq.s32.totalorder %v238, %v42
    %vm243 = vcmp.eq.s32.totalorder %v238, %v43
    %vm244 = vcmp.eq.s32.totalorder %v238, %v44
    %vm245 = vcmp.eq.s32.totalorder %v238, %v45
    %vm246 = vcmp.eq.s32.totalorder %v238, %v46
    %v248 = vlaneseq
    %v249 = vshrl.u32 %v248, 7
    %v250 = vsub.s32 0, %v249
    %v251 = vrot.slane %v200, %v250
    %v253 = vsel %vm239, %v251, 0.0
    %v254 = vsel %vm240, %v251, 0.0
    %v255 = vsel %vm241, %v251, 0.0
    %v256 = vsel %vm242, %v251, 0.0
    %v257 = vsel %vm243, %v251, 0.0
    %v258 = vsel %vm244, %v251, 0.0
    %v259 = vsel %vm245, %v251, 0.0
    %v260 = vsel %vm246, %v251, 0.0
    %v261 = vadd.f32 %v187, %v253
    %v262 = vadd.f32 %v188, %v254
    %v263 = vadd.f32 %v189, %v255
    %v264 = vadd.f32 %v190, %v256
    %v265 = vadd.f32 %v191, %v257
    %v266 = vadd.f32 %v192, %v258
    %v267 = vadd.f32 %v193, %v259
    %v268 = vadd.f32 %v194, %v260
    %v269 = vld [vmem:[%s0 + $0x3] sm:$0x1]
    %v270 = vld [vmem:[%s1 + $0x3] sm:$0x1]
    %vm271 = vcmp.gt.s32.totalorder %v26, 3
    %v272 = vsel %vm271, %v32, 0.0
    %vm273 = vcmp.gt.s32.totalorder %v27, 3
    %v274 = vsel %vm273, %v37, 0.0
    %v275 = vlaneseq
    %v276 = vshrl.u32 %v275, 7
    %v277 = vsub.s32 0, %v276
    %v278 = vrot.slane %v269, %v277
    %vm279 = vcmp.eq.s32.totalorder %v278, %v39
    %vm280 = vcmp.eq.s32.totalorder %v278, %v40
    %vm281 = vcmp.eq.s32.totalorder %v278, %v41
    %vm282 = vcmp.eq.s32.totalorder %v278, %v42
    %vm283 = vcmp.eq.s32.totalorder %v278, %v43
    %vm284 = vcmp.eq.s32.totalorder %v278, %v44
    %vm285 = vcmp.eq.s32.totalorder %v278, %v45
    %vm286 = vcmp.eq.s32.totalorder %v278, %v46
    %v288 = vlaneseq
    %v289 = vshrl.u32 %v288, 7
    %v290 = vsub.s32 0, %v289
    %v291 = vrot.slane %v272, %v290
    %v293 = vsel %vm279, %v291, 0.0
    %v294 = vsel %vm280, %v291, 0.0
    %v295 = vsel %vm281, %v291, 0.0
    %v296 = vsel %vm282, %v291, 0.0
    %v297 = vsel %vm283, %v291, 0.0
    %v298 = vsel %vm284, %v291, 0.0
    %v299 = vsel %vm285, %v291, 0.0
    %v300 = vsel %vm286, %v291, 0.0
    %v301 = vadd.f32 %v227, %v293
    %v302 = vadd.f32 %v228, %v294
    %v303 = vadd.f32 %v229, %v295
    %v304 = vadd.f32 %v230, %v296
    %v305 = vadd.f32 %v231, %v297
    %v306 = vadd.f32 %v232, %v298
    %v307 = vadd.f32 %v233, %v299
    %v308 = vadd.f32 %v234, %v300
    %v309 = vlaneseq
    %v310 = vshrl.u32 %v309, 7
    %v311 = vsub.s32 0, %v310
    %v312 = vrot.slane %v270, %v311
    %vm313 = vcmp.eq.s32.totalorder %v312, %v39
    %vm314 = vcmp.eq.s32.totalorder %v312, %v40
    %vm315 = vcmp.eq.s32.totalorder %v312, %v41
    %vm316 = vcmp.eq.s32.totalorder %v312, %v42
    %vm317 = vcmp.eq.s32.totalorder %v312, %v43
    %vm318 = vcmp.eq.s32.totalorder %v312, %v44
    %vm319 = vcmp.eq.s32.totalorder %v312, %v45
    %vm320 = vcmp.eq.s32.totalorder %v312, %v46
    %v322 = vlaneseq
    %v323 = vshrl.u32 %v322, 7
    %v324 = vsub.s32 0, %v323
    %v325 = vrot.slane %v274, %v324
    %v327 = vsel %vm313, %v325, 0.0
    %v328 = vsel %vm314, %v325, 0.0
    %v329 = vsel %vm315, %v325, 0.0
    %v330 = vsel %vm316, %v325, 0.0
    %v331 = vsel %vm317, %v325, 0.0
    %v332 = vsel %vm318, %v325, 0.0
    %v333 = vsel %vm319, %v325, 0.0
    %v334 = vsel %vm320, %v325, 0.0
    %v335 = vadd.f32 %v261, %v327
    %v336 = vadd.f32 %v262, %v328
    %v337 = vadd.f32 %v263, %v329
    %v338 = vadd.f32 %v264, %v330
    %v339 = vadd.f32 %v265, %v331
    %v340 = vadd.f32 %v266, %v332
    %v341 = vadd.f32 %v267, %v333
    %v342 = vadd.f32 %v268, %v334
    %v343 = vld [vmem:[%s0 + $0x4] sm:$0x1]
    %v344 = vld [vmem:[%s1 + $0x4] sm:$0x1]
    %vm345 = vcmp.gt.s32.totalorder %v26, 4
    %v346 = vsel %vm345, %v32, 0.0
    %vm347 = vcmp.gt.s32.totalorder %v27, 4
    %v348 = vsel %vm347, %v37, 0.0
    %v349 = vlaneseq
    %v350 = vshrl.u32 %v349, 7
    %v351 = vsub.s32 0, %v350
    %v352 = vrot.slane %v343, %v351
    %vm353 = vcmp.eq.s32.totalorder %v352, %v39
    %vm354 = vcmp.eq.s32.totalorder %v352, %v40
    %vm355 = vcmp.eq.s32.totalorder %v352, %v41
    %vm356 = vcmp.eq.s32.totalorder %v352, %v42
    %vm357 = vcmp.eq.s32.totalorder %v352, %v43
    %vm358 = vcmp.eq.s32.totalorder %v352, %v44
    %vm359 = vcmp.eq.s32.totalorder %v352, %v45
    %vm360 = vcmp.eq.s32.totalorder %v352, %v46
    %v362 = vlaneseq
    %v363 = vshrl.u32 %v362, 7
    %v364 = vsub.s32 0, %v363
    %v365 = vrot.slane %v346, %v364
    %v367 = vsel %vm353, %v365, 0.0
    %v368 = vsel %vm354, %v365, 0.0
    %v369 = vsel %vm355, %v365, 0.0
    %v370 = vsel %vm356, %v365, 0.0
    %v371 = vsel %vm357, %v365, 0.0
    %v372 = vsel %vm358, %v365, 0.0
    %v373 = vsel %vm359, %v365, 0.0
    %v374 = vsel %vm360, %v365, 0.0
    %v375 = vadd.f32 %v301, %v367
    %v376 = vadd.f32 %v302, %v368
    %v377 = vadd.f32 %v303, %v369
    %v378 = vadd.f32 %v304, %v370
    %v379 = vadd.f32 %v305, %v371
    %v380 = vadd.f32 %v306, %v372
    %v381 = vadd.f32 %v307, %v373
    %v382 = vadd.f32 %v308, %v374
    %v383 = vlaneseq
    %v384 = vshrl.u32 %v383, 7
    %v385 = vsub.s32 0, %v384
    %v386 = vrot.slane %v344, %v385
    %vm387 = vcmp.eq.s32.totalorder %v386, %v39
    %vm388 = vcmp.eq.s32.totalorder %v386, %v40
    %vm389 = vcmp.eq.s32.totalorder %v386, %v41
    %vm390 = vcmp.eq.s32.totalorder %v386, %v42
    %vm391 = vcmp.eq.s32.totalorder %v386, %v43
    %vm392 = vcmp.eq.s32.totalorder %v386, %v44
    %vm393 = vcmp.eq.s32.totalorder %v386, %v45
    %vm394 = vcmp.eq.s32.totalorder %v386, %v46
    %v396 = vlaneseq
    %v397 = vshrl.u32 %v396, 7
    %v398 = vsub.s32 0, %v397
    %v399 = vrot.slane %v348, %v398
    %v401 = vsel %vm387, %v399, 0.0
    %v402 = vsel %vm388, %v399, 0.0
    %v403 = vsel %vm389, %v399, 0.0
    %v404 = vsel %vm390, %v399, 0.0
    %v405 = vsel %vm391, %v399, 0.0
    %v406 = vsel %vm392, %v399, 0.0
    %v407 = vsel %vm393, %v399, 0.0
    %v408 = vsel %vm394, %v399, 0.0
    %v409 = vadd.f32 %v335, %v401
    %v410 = vadd.f32 %v336, %v402
    %v411 = vadd.f32 %v337, %v403
    %v412 = vadd.f32 %v338, %v404
    %v413 = vadd.f32 %v339, %v405
    %v414 = vadd.f32 %v340, %v406
    %v415 = vadd.f32 %v341, %v407
    %v416 = vadd.f32 %v342, %v408
    %v417 = vld [vmem:[%s0 + $0x5] sm:$0x1]
    %v418 = vld [vmem:[%s1 + $0x5] sm:$0x1]
    %vm419 = vcmp.gt.s32.totalorder %v26, 5
    %v420 = vsel %vm419, %v32, 0.0
    %vm421 = vcmp.gt.s32.totalorder %v27, 5
    %v422 = vsel %vm421, %v37, 0.0
    %v423 = vlaneseq
    %v424 = vshrl.u32 %v423, 7
    %v425 = vsub.s32 0, %v424
    %v426 = vrot.slane %v417, %v425
    %vm427 = vcmp.eq.s32.totalorder %v426, %v39
    %vm428 = vcmp.eq.s32.totalorder %v426, %v40
    %vm429 = vcmp.eq.s32.totalorder %v426, %v41
    %vm430 = vcmp.eq.s32.totalorder %v426, %v42
    %vm431 = vcmp.eq.s32.totalorder %v426, %v43
    %vm432 = vcmp.eq.s32.totalorder %v426, %v44
    %vm433 = vcmp.eq.s32.totalorder %v426, %v45
    %vm434 = vcmp.eq.s32.totalorder %v426, %v46
    %v436 = vlaneseq
    %v437 = vshrl.u32 %v436, 7
    %v438 = vsub.s32 0, %v437
    %v439 = vrot.slane %v420, %v438
    %v441 = vsel %vm427, %v439, 0.0
    %v442 = vsel %vm428, %v439, 0.0
    %v443 = vsel %vm429, %v439, 0.0
    %v444 = vsel %vm430, %v439, 0.0
    %v445 = vsel %vm431, %v439, 0.0
    %v446 = vsel %vm432, %v439, 0.0
    %v447 = vsel %vm433, %v439, 0.0
    %v448 = vsel %vm434, %v439, 0.0
    %v449 = vadd.f32 %v375, %v441
    %v450 = vadd.f32 %v376, %v442
    %v451 = vadd.f32 %v377, %v443
    %v452 = vadd.f32 %v378, %v444
    %v453 = vadd.f32 %v379, %v445
    %v454 = vadd.f32 %v380, %v446
    %v455 = vadd.f32 %v381, %v447
    %v456 = vadd.f32 %v382, %v448
    %v457 = vlaneseq
    %v458 = vshrl.u32 %v457, 7
    %v459 = vsub.s32 0, %v458
    %v460 = vrot.slane %v418, %v459
    %vm461 = vcmp.eq.s32.totalorder %v460, %v39
    %vm462 = vcmp.eq.s32.totalorder %v460, %v40
    %vm463 = vcmp.eq.s32.totalorder %v460, %v41
    %vm464 = vcmp.eq.s32.totalorder %v460, %v42
    %vm465 = vcmp.eq.s32.totalorder %v460, %v43
    %vm466 = vcmp.eq.s32.totalorder %v460, %v44
    %vm467 = vcmp.eq.s32.totalorder %v460, %v45
    %vm468 = vcmp.eq.s32.totalorder %v460, %v46
    %v470 = vlaneseq
    %v471 = vshrl.u32 %v470, 7
    %v472 = vsub.s32 0, %v471
    %v473 = vrot.slane %v422, %v472
    %v475 = vsel %vm461, %v473, 0.0
    %v476 = vsel %vm462, %v473, 0.0
    %v477 = vsel %vm463, %v473, 0.0
    %v478 = vsel %vm464, %v473, 0.0
    %v479 = vsel %vm465, %v473, 0.0
    %v480 = vsel %vm466, %v473, 0.0
    %v481 = vsel %vm467, %v473, 0.0
    %v482 = vsel %vm468, %v473, 0.0
    %v483 = vadd.f32 %v409, %v475
    %v484 = vadd.f32 %v410, %v476
    %v485 = vadd.f32 %v411, %v477
    %v486 = vadd.f32 %v412, %v478
    %v487 = vadd.f32 %v413, %v479
    %v488 = vadd.f32 %v414, %v480
    %v489 = vadd.f32 %v415, %v481
    %v490 = vadd.f32 %v416, %v482
    %v491 = vld [vmem:[%s0 + $0x6] sm:$0x1]
    %v492 = vld [vmem:[%s1 + $0x6] sm:$0x1]
    %vm493 = vcmp.gt.s32.totalorder %v26, 6
    %v494 = vsel %vm493, %v32, 0.0
    %vm495 = vcmp.gt.s32.totalorder %v27, 6
    %v496 = vsel %vm495, %v37, 0.0
    %v497 = vlaneseq
    %v498 = vshrl.u32 %v497, 7
    %v499 = vsub.s32 0, %v498
    %v500 = vrot.slane %v491, %v499
    %vm501 = vcmp.eq.s32.totalorder %v500, %v39
    %vm502 = vcmp.eq.s32.totalorder %v500, %v40
    %vm503 = vcmp.eq.s32.totalorder %v500, %v41
    %vm504 = vcmp.eq.s32.totalorder %v500, %v42
    %vm505 = vcmp.eq.s32.totalorder %v500, %v43
    %vm506 = vcmp.eq.s32.totalorder %v500, %v44
    %vm507 = vcmp.eq.s32.totalorder %v500, %v45
    %vm508 = vcmp.eq.s32.totalorder %v500, %v46
    %v510 = vlaneseq
    %v511 = vshrl.u32 %v510, 7
    %v512 = vsub.s32 0, %v511
    %v513 = vrot.slane %v494, %v512
    %v515 = vsel %vm501, %v513, 0.0
    %v516 = vsel %vm502, %v513, 0.0
    %v517 = vsel %vm503, %v513, 0.0
    %v518 = vsel %vm504, %v513, 0.0
    %v519 = vsel %vm505, %v513, 0.0
    %v520 = vsel %vm506, %v513, 0.0
    %v521 = vsel %vm507, %v513, 0.0
    %v522 = vsel %vm508, %v513, 0.0
    %v523 = vadd.f32 %v449, %v515
    %v524 = vadd.f32 %v450, %v516
    %v525 = vadd.f32 %v451, %v517
    %v526 = vadd.f32 %v452, %v518
    %v527 = vadd.f32 %v453, %v519
    %v528 = vadd.f32 %v454, %v520
    %v529 = vadd.f32 %v455, %v521
    %v530 = vadd.f32 %v456, %v522
    %v531 = vlaneseq
    %v532 = vshrl.u32 %v531, 7
    %v533 = vsub.s32 0, %v532
    %v534 = vrot.slane %v492, %v533
    %vm535 = vcmp.eq.s32.totalorder %v534, %v39
    %vm536 = vcmp.eq.s32.totalorder %v534, %v40
    %vm537 = vcmp.eq.s32.totalorder %v534, %v41
    %vm538 = vcmp.eq.s32.totalorder %v534, %v42
    %vm539 = vcmp.eq.s32.totalorder %v534, %v43
    %vm540 = vcmp.eq.s32.totalorder %v534, %v44
    %vm541 = vcmp.eq.s32.totalorder %v534, %v45
    %vm542 = vcmp.eq.s32.totalorder %v534, %v46
    %v544 = vlaneseq
    %v545 = vshrl.u32 %v544, 7
    %v546 = vsub.s32 0, %v545
    %v547 = vrot.slane %v496, %v546
    %v549 = vsel %vm535, %v547, 0.0
    %v550 = vsel %vm536, %v547, 0.0
    %v551 = vsel %vm537, %v547, 0.0
    %v552 = vsel %vm538, %v547, 0.0
    %v553 = vsel %vm539, %v547, 0.0
    %v554 = vsel %vm540, %v547, 0.0
    %v555 = vsel %vm541, %v547, 0.0
    %v556 = vsel %vm542, %v547, 0.0
    %v557 = vadd.f32 %v483, %v549
    %v558 = vadd.f32 %v484, %v550
    %v559 = vadd.f32 %v485, %v551
    %v560 = vadd.f32 %v486, %v552
    %v561 = vadd.f32 %v487, %v553
    %v562 = vadd.f32 %v488, %v554
    %v563 = vadd.f32 %v489, %v555
    %v564 = vadd.f32 %v490, %v556
    %v565 = vld [vmem:[%s0 + $0x7] sm:$0x1]
    %v566 = vld [vmem:[%s1 + $0x7] sm:$0x1]
    %vm567 = vcmp.gt.s32.totalorder %v26, 7
    %v568 = vsel %vm567, %v32, 0.0
    %vm569 = vcmp.gt.s32.totalorder %v27, 7
    %v570 = vsel %vm569, %v37, 0.0
    %v571 = vlaneseq
    %v572 = vshrl.u32 %v571, 7
    %v573 = vsub.s32 0, %v572
    %v574 = vrot.slane %v565, %v573
    %vm575 = vcmp.eq.s32.totalorder %v574, %v39
    %vm576 = vcmp.eq.s32.totalorder %v574, %v40
    %vm577 = vcmp.eq.s32.totalorder %v574, %v41
    %vm578 = vcmp.eq.s32.totalorder %v574, %v42
    %vm579 = vcmp.eq.s32.totalorder %v574, %v43
    %vm580 = vcmp.eq.s32.totalorder %v574, %v44
    %vm581 = vcmp.eq.s32.totalorder %v574, %v45
    %vm582 = vcmp.eq.s32.totalorder %v574, %v46
    %v584 = vlaneseq
    %v585 = vshrl.u32 %v584, 7
    %v586 = vsub.s32 0, %v585
    %v587 = vrot.slane %v568, %v586
    %v589 = vsel %vm575, %v587, 0.0
    %v590 = vsel %vm576, %v587, 0.0
    %v591 = vsel %vm577, %v587, 0.0
    %v592 = vsel %vm578, %v587, 0.0
    %v593 = vsel %vm579, %v587, 0.0
    %v594 = vsel %vm580, %v587, 0.0
    %v595 = vsel %vm581, %v587, 0.0
    %v596 = vsel %vm582, %v587, 0.0
    %v597 = vadd.f32 %v523, %v589
    %v598 = vadd.f32 %v524, %v590
    %v599 = vadd.f32 %v525, %v591
    %v600 = vadd.f32 %v526, %v592
    %v601 = vadd.f32 %v527, %v593
    %v602 = vadd.f32 %v528, %v594
    %v603 = vadd.f32 %v529, %v595
    %v604 = vadd.f32 %v530, %v596
    %v605 = vlaneseq
    %v606 = vshrl.u32 %v605, 7
    %v607 = vsub.s32 0, %v606
    %v608 = vrot.slane %v566, %v607
    %vm609 = vcmp.eq.s32.totalorder %v608, %v39
    %vm610 = vcmp.eq.s32.totalorder %v608, %v40
    %vm611 = vcmp.eq.s32.totalorder %v608, %v41
    %vm612 = vcmp.eq.s32.totalorder %v608, %v42
    %vm613 = vcmp.eq.s32.totalorder %v608, %v43
    %vm614 = vcmp.eq.s32.totalorder %v608, %v44
    %vm615 = vcmp.eq.s32.totalorder %v608, %v45
    %vm616 = vcmp.eq.s32.totalorder %v608, %v46
    %v618 = vlaneseq
    %v619 = vshrl.u32 %v618, 7
    %v620 = vsub.s32 0, %v619
    %v621 = vrot.slane %v570, %v620
    %v623 = vsel %vm609, %v621, 0.0
    %v624 = vsel %vm610, %v621, 0.0
    %v625 = vsel %vm611, %v621, 0.0
    %v626 = vsel %vm612, %v621, 0.0
    %v627 = vsel %vm613, %v621, 0.0
    %v628 = vsel %vm614, %v621, 0.0
    %v629 = vsel %vm615, %v621, 0.0
    %v630 = vsel %vm616, %v621, 0.0
    %v631 = vadd.f32 %v557, %v623
    %v632 = vadd.f32 %v558, %v624
    %v633 = vadd.f32 %v559, %v625
    %v634 = vadd.f32 %v560, %v626
    %v635 = vadd.f32 %v561, %v627
    %v636 = vadd.f32 %v562, %v628
    %v637 = vadd.f32 %v563, %v629
    %v638 = vadd.f32 %v564, %v630
    %v639 = vld [vmem:[%s4] sm:$0xff]
    %v640 = vld [vmem:[%s4 + $0x8] sm:$0xff]
    %v641 = vld [vmem:[%s4 + $0x10] sm:$0xff]
    %v642 = vld [vmem:[%s4 + $0x18] sm:$0xff]
    %v643 = vld [vmem:[%s4 + $0x20] sm:$0xff]
    %v644 = vld [vmem:[%s4 + $0x28] sm:$0xff]
    %v645 = vld [vmem:[%s4 + $0x30] sm:$0xff]
    %v646 = vld [vmem:[%s4 + $0x38] sm:$0xff]
    %v647 = vld [vmem:[#allocation2] sm:$0x1]
    %649 = vset.pattern.permute.xlu0 0
    %650 = vperm.xlu0 %649, %v639
    %v651 = vpop.permute.xlu0 %650
    %654 = vset.pattern.permute.xlu0 0
    %655 = vperm.xlu0 %654, %v640
    %v656 = vpop.permute.xlu0 %655
    %659 = vset.pattern.permute.xlu0 0
    %660 = vperm.xlu0 %659, %v641
    %v661 = vpop.permute.xlu0 %660
    %664 = vset.pattern.permute.xlu0 0
    %665 = vperm.xlu0 %664, %v642
    %v666 = vpop.permute.xlu0 %665
    %669 = vset.pattern.permute.xlu0 0
    %670 = vperm.xlu0 %669, %v643
    %v671 = vpop.permute.xlu0 %670
    %674 = vset.pattern.permute.xlu0 0
    %675 = vperm.xlu0 %674, %v644
    %v676 = vpop.permute.xlu0 %675
    %679 = vset.pattern.permute.xlu0 0
    %680 = vperm.xlu0 %679, %v645
    %v681 = vpop.permute.xlu0 %680
    %684 = vset.pattern.permute.xlu0 0
    %685 = vperm.xlu0 %684, %v646
    %v686 = vpop.permute.xlu0 %685
    %v688 = vmul.f32 %v597, %v651
    %v689 = vmul.f32 %v598, %v656
    %v690 = vmul.f32 %v599, %v661
    %v691 = vmul.f32 %v600, %v666
    %v692 = vmul.f32 %v601, %v671
    %v693 = vmul.f32 %v602, %v676
    %v694 = vmul.f32 %v603, %v681
    %v695 = vmul.f32 %v604, %v686
    %vm696 = vcmask 64512
    %v697 = vsel %vm696, %v688, 0.0
    %v698 = vsel %vm696, %v689, 0.0
    %v699 = vadd.f32 %v697, %v698
    %v700 = vsel %vm696, %v690, 0.0
    %v701 = vadd.f32 %v699, %v700
    %v702 = vsel %vm696, %v691, 0.0
    %v703 = vadd.f32 %v701, %v702
    %v704 = vsel %vm696, %v692, 0.0
    %v705 = vadd.f32 %v703, %v704
    %v706 = vsel %vm696, %v693, 0.0
    %v707 = vadd.f32 %v705, %v706
    %v708 = vsel %vm696, %v694, 0.0
    %v709 = vadd.f32 %v707, %v708
    %v710 = vsel %vm696, %v695, 0.0
    %v711 = vadd.f32 %v709, %v710
    %v712 = vrot.slane %v711, 4
    %v713 = vadd.f32 %v711, %v712
    %v714 = vrot.slane %v713, 2
    %v715 = vadd.f32 %v713, %v714
    %v716 = vrot.slane %v715, 1
    %v717 = vadd.f32 %v715, %v716
    %719 = vset.pattern.permute.xlu0 0
    %720 = vperm.xlu0 %719, %v647
    %v721 = vpop.permute.xlu0 %720
    %v723 = vlaneseq
    %v724 = vshrl.u32 %v723, 7
    %v725 = vsub.s32 0, %v724
    %v726 = vrot.slane %v721, %v725
    %v727 = vadd.f32 %v717, %v726
    %v728 = vmul.f32 %v631, %v651
    %v729 = vmul.f32 %v632, %v656
    %v730 = vmul.f32 %v633, %v661
    %v731 = vmul.f32 %v634, %v666
    %v732 = vmul.f32 %v635, %v671
    %v733 = vmul.f32 %v636, %v676
    %v734 = vmul.f32 %v637, %v681
    %v735 = vmul.f32 %v638, %v686
    %v736 = vsel %vm696, %v728, 0.0
    %v737 = vsel %vm696, %v729, 0.0
    %v738 = vadd.f32 %v736, %v737
    %v739 = vsel %vm696, %v730, 0.0
    %v740 = vadd.f32 %v738, %v739
    %v741 = vsel %vm696, %v731, 0.0
    %v742 = vadd.f32 %v740, %v741
    %v743 = vsel %vm696, %v732, 0.0
    %v744 = vadd.f32 %v742, %v743
    %v745 = vsel %vm696, %v733, 0.0
    %v746 = vadd.f32 %v744, %v745
    %v747 = vsel %vm696, %v734, 0.0
    %v748 = vadd.f32 %v746, %v747
    %v749 = vsel %vm696, %v735, 0.0
    %v750 = vadd.f32 %v748, %v749
    %v751 = vrot.slane %v750, 4
    %v752 = vadd.f32 %v750, %v751
    %v753 = vrot.slane %v752, 2
    %v754 = vadd.f32 %v752, %v753
    %v755 = vrot.slane %v754, 1
    %v756 = vadd.f32 %v754, %v755
    %v757 = vadd.f32 %v756, %v726
    %v758 = vsub.f32 %v757, %v727
    %v759 = vmul.f32 %v758, 1.442695
    %v760 = vpow.pop %v759
    %v761 = vadd.f32 %v760, 1.0
    %v762 = vrcp.pop %v761
    %v763 = vmul.f32 1.0, %v762
    %vm764 = vcmask 57344
    %765 = vst.msk [vmem:[#allocation3] sm:$0x1] %vm764, %v763
    // Predicated region
    $region26: #{tpu_custom_call.1} parent=1 // pred_check
      _
    $region27: #{tpu_custom_call.1} parent=1 // pred_check_branch
      %767 = sbr.rel (0) target = $region29
    $region28: #{tpu_custom_call.1} parent=1 // pred_region
      %s769 = ssub.s32 16, 16
      %770 = vsyncadd [#allocation4], %s769
      %s772 = sshll.u32 [#allocation3], 4
      %s773 = int_to_ptr.vmem [resolvable:$true] %s772
      %775 = dma.vmem_to_hbm [thread:$0]  %s773, 16, %s6, [#allocation4]
    $region29: #{tpu_custom_call.1} parent=1 // pred_fallthru
      _
    // Predicated region
    $region30: #{tpu_custom_call.1} parent=1 // pred_check
      _
    $region31: #{tpu_custom_call.1} parent=1 // pred_check_branch
      %777 = sbr.rel (0) target = $region33
    $region32: #{tpu_custom_call.1} parent=1 // pred_region
      %778 = dma.done [#allocation4], 16
    $region33: #{tpu_custom_call.1} parent=1 // pred_fallthru
      _
    %779 = vsyncpa [#allocation4], 1

</llo_original>
